<compile_context>
chip_gen: v5e
topology: v5e:2x2
jax: 0.10.0
libtpu: 0.0.40
codegen_flags: <defaults>
</compile_context>

<pallas_src>
import functools

import jax
import jax.numpy as jnp
from jax.experimental import pallas as pl
from jax.experimental.pallas import tpu as pltpu

_DEFAULT_BLOCK_B = 512   # batch rows per grid step (before balancing / shrink)
_DEFAULT_BLOCK_K = 512   # D_in columns per grid step (multiple of 256)


def _cdiv(a: int, b: int) -> int:
    return -(-a // b)


def _round_up(n: int, m: int) -> int:
    return _cdiv(n, m) * m


def _tpu_generation() -> str:
    """Best-effort TPU generation tag ("v5" / "v6" / "v7" / "unknown")."""
    try:
        kind = jax.devices()[0].device_kind.lower()
    except Exception:
        return "unknown"
    for gen in ("v7", "v6", "v5"):
        if gen in kind:
            return gen
    return "unknown"


def _vmem_capacity_bytes(gen: str) -> int:
    try:
        return int(pltpu.get_tpu_info().vmem_capacity_bytes)
    except Exception:
        # v7x: 64 MiB VMEM per TensorCore; v5e / v6e: 128 MiB.
        return (64 << 20) if gen == "v7" else (128 << 20)


def _padded_feature_dims(d_in: int, d_out: int, gen: str, block_k: int):
    """Lane-dense padding targets, MXU-width aware."""
    wide = gen in ("v6", "v7")        # 2x256x256 MXU -> prefer 256-multiples

    def pad(d: int) -> int:
        p = _round_up(d, 128)
        if wide and p > 128:          # keep tiny dims at 128 (less padded waste)
            p = _round_up(d, 256)
        return p

    d_in_p, d_out_p = pad(d_in), pad(d_out)
    if d_in_p > block_k:              # make the K grid tiles divide evenly
        d_in_p = _round_up(d_in_p, block_k)
    return d_in_p, d_out_p


def prepare_params(w, b, *, block_k: int = _DEFAULT_BLOCK_K):
    """Pad + cast the Linear parameters ONCE (hoisted out of the forward path).

    w: [D_in, D_out]  (transposed vs. torch's [D_out, D_in] weight)
    b: [D_out] or [1, D_out]
    Returns (w_p bf16 [D_in_p, D_out_p], b_p f32 [1, D_out_p]); padded output
    columns get bias -1e30 so they vanish from the log-softmax normalizer.
    """
    d_in, d_out = w.shape
    gen = _tpu_generation()
    d_in_p, d_out_p = _padded_feature_dims(d_in, d_out, gen, block_k)
    w_p = jnp.zeros((d_in_p, d_out_p), jnp.bfloat16).at[:d_in, :d_out].set(
        w.astype(jnp.bfloat16))
    b_p = jnp.full((1, d_out_p), -1e30, jnp.float32).at[:, :d_out].set(
        jnp.reshape(b, (1, d_out)).astype(jnp.float32))
    return w_p, b_p


def _logit_kernel(x_ref, w_ref, b_ref, o_ref, acc_ref):
    """Grid = (batch tiles, K tiles).  K is a reduction -> accumulator pattern."""
    k = pl.program_id(1)

    @pl.when(k == 0)
    def _():
        acc_ref[...] = jnp.zeros_like(acc_ref)

    # MXU matmul: bf16 inputs (x cast on the fly if fed as f32), f32 accumulate.
    acc_ref[...] += jnp.dot(
        x_ref[...].astype(jnp.bfloat16), w_ref[...],
        preferred_element_type=jnp.float32)

    @pl.when(k == pl.num_programs(1) - 1)
    def _():
        # Numerically stable log-softmax over the last axis (torch dim=1).
        # Padded columns have bias -1e30 -> exp underflows to exactly 0.
        scores = acc_ref[...] + b_ref[...]
        m = jnp.max(scores, axis=-1, keepdims=True)
        z = scores - m
        lse = jnp.log(jnp.sum(jnp.exp(z), axis=-1, keepdims=True))
        o_ref[...] = (z - lse).astype(o_ref.dtype)


@functools.partial(jax.jit,
                   static_argnames=("d_out", "block_b", "block_k", "out_dtype"))
def torch_logit_forward(x, w_p, b_p, *, d_out,
                        block_b: int = _DEFAULT_BLOCK_B,
                        block_k: int = _DEFAULT_BLOCK_K,
                        out_dtype=jnp.float32):
    """log_softmax(x @ W + b, axis=1) with pre-padded params from prepare_params."""
    B, D_in = x.shape
    D_in_p, D_out_p = w_p.shape
    gen = _tpu_generation()

    # ---- batch tiling: balanced tiles, multiple of 8 sublanes -------------
    B8 = _round_up(B, 8)
    n_b = _cdiv(B8, block_b)
    if gen == "v7" and n_b == 1 and B8 >= 16:
        n_b = 2                      # let the 2 TensorCores both get work
    TB = _round_up(_cdiv(B8, n_b), 8)
    B_p = TB * n_b

    # ---- K (D_in) tiling ---------------------------------------------------
    if D_in_p <= block_k or (D_in_p % block_k) != 0:
        TK, n_k = D_in_p, 1          # single K tile (small D_in / mismatched block_k)
    else:
        TK, n_k = block_k, D_in_p // block_k

    # ---- generation-aware VMEM budget + auto-shrink ------------------------
    x_isz = x.dtype.itemsize
    out_isz = jnp.dtype(out_dtype).itemsize
    budget = int(_vmem_capacity_bytes(gen) * 0.85)   # ~54 MiB v7x, ~108 MiB v5e/v6e

    def est(tb, tk):
        return (2 * tb * tk * x_isz            # x tiles (double-buffered)
                + 2 * tk * D_out_p * 2         # W tiles (bf16, double-buffered)
                + 2 * tb * D_out_p * out_isz   # output tiles (double-buffered)
                + tb * D_out_p * 4             # f32 accumulator scratch
                + 2 * D_out_p * 4              # bias
                + (2 << 20))                   # compiler-internal slack

    while est(TB, TK) > budget and TB > 8:
        TB = max(8, _round_up(TB // 2, 8))
        n_b = _cdiv(B8, TB)
        B_p = TB * n_b
    vmem_limit = int(min(max(est(TB, TK), 16 << 20), budget))

    # ---- activation padding: skip entirely when already aligned ------------
    if (B_p != B) or (D_in_p != D_in):
        x_in = jnp.zeros((B_p, D_in_p), jnp.bfloat16).at[:B, :D_in].set(
            x.astype(jnp.bfloat16))
    else:
        x_in = x                      # f32 straight through; kernel casts to bf16

    flops = 2 * B_p * D_in_p * D_out_p
    bytes_accessed = (B_p * D_in_p * x_in.dtype.itemsize
                      + D_in_p * D_out_p * 2
                      + D_out_p * 4
                      + B_p * D_out_p * out_isz)

    out_padded = pl.pallas_call(
        _logit_kernel,
        out_shape=jax.ShapeDtypeStruct((B_p, D_out_p), out_dtype),
        grid=(n_b, n_k),
        in_specs=[
            pl.BlockSpec((TB, TK), lambda i, k: (i, k)),         # x: batch x K tiles
            pl.BlockSpec((TK, D_out_p), lambda i, k: (k, 0)),    # W: streamed over K
            pl.BlockSpec((1, D_out_p), lambda i, k: (0, 0)),     # bias: resident
        ],
        out_specs=pl.BlockSpec((TB, D_out_p), lambda i, k: (i, 0)),
        scratch_shapes=[pltpu.VMEM((TB, D_out_p), jnp.float32)],
        compiler_params=pltpu.CompilerParams(
            dimension_semantics=("parallel", "arbitrary"),
            vmem_limit_bytes=vmem_limit,
        ),
        cost_estimate=pl.CostEstimate(
            flops=flops,
            transcendentals=B_p * D_out_p,
            bytes_accessed=bytes_accessed),
    )(x_in, w_p, b_p)

    return out_padded[:B, :d_out]


def _reference(x, w, b):
    # Same bf16 rounding of the MXU inputs, f32 math everywhere else.
    x_r = x.astype(jnp.bfloat16).astype(jnp.float32)
    w_r = w.astype(jnp.bfloat16).astype(jnp.float32)
    return jax.nn.log_softmax(x_r @ w_r + jnp.reshape(b, (1, -1)), axis=-1)


if __name__ == "__main__":
    def run_case(key, B, D_in, D_out):
        kx, kw, kb = jax.random.split(key, 3)
        bound = 1.0 / (D_in ** 0.5)   # PyTorch nn.Linear-style uniform init bound
        w = jax.random.uniform(kw, (D_in, D_out), jnp.float32, -bound, bound)
        b = jax.random.uniform(kb, (D_out,), jnp.float32, -bound, bound)
        x = jax.random.normal(kx, (B, D_in), jnp.float32)

        w_p, b_p = prepare_params(w, b)            # once, outside the hot path
        y = torch_logit_forward(x, w_p, b_p, d_out=D_out)
        jax.block_until_ready(y)

        ref = _reference(x, w, b)
        assert y.shape == (B, D_out), y.shape
        err = float(jnp.max(jnp.abs(y - ref)))
        # NOTE: loosen tolerance if D_in is scaled up (bf16-product summation
        # order differences grow ~with K).
        assert err < 2e-4, err

    root = jax.random.PRNGKey(0)
    run_case(root, B=8, D_in=32, D_out=16)                           # module-sized
    run_case(jax.random.fold_in(root, 1), B=16, D_in=128, D_out=10)  # aligned -> no x pad pass
    run_case(jax.random.fold_in(root, 2), B=20, D_in=96, D_out=10)   # unaligned batch
    print("KERNEL_OK")
</pallas_src>

<mosaic_0001>
module attributes {stable_mosaic.version = 11 : i64} {
  func.func @_logit_kernel(%arg0: i32, %arg1: i32, %arg2: memref<8x128xbf16, #tpu.memory_space<vmem>>, %arg3: memref<128x128xbf16, #tpu.memory_space<vmem>>, %arg4: memref<1x128xf32, #tpu.memory_space<vmem>>, %arg5: memref<8x128xf32, #tpu.memory_space<vmem>>, %arg6: memref<8x128xf32, #tpu.memory_space<vmem>>) attributes {dimension_semantics = [#tpu.dimension_semantics<parallel>, #tpu.dimension_semantics<arbitrary>], iteration_bounds = array<i64: 1, 1>, scalar_prefetch = 0 : i64, scratch_operands = 1 : i64, tpu.core_type = #tpu.core_type<tc>, window_params = [{transform_indices = @transform_0, window_bounds = array<i64: 8, 128>}, {transform_indices = @transform_1, window_bounds = array<i64: 128, 128>}, {pipeline_mode = #tpu.pipeline_mode<synchronous>, transform_indices = @transform_2, window_bounds = array<i64: 1, 128>}, {transform_indices = @transform_3, window_bounds = array<i64: 8, 128>}]} {
    %c0_i32 = arith.constant 0 : i32
    %0 = arith.cmpi eq, %arg1, %c0_i32 : i32
    %1 = arith.extui %0 : i1 to i32
    %c0_i32_0 = arith.constant 0 : i32
    %2 = arith.cmpi ne, %1, %c0_i32_0 : i32
    scf.if %2 {
      %cst_10 = arith.constant 0.000000e+00 : f32
      %12 = vector.broadcast %cst_10 : f32 to vector<8x128xf32>
      %c0_11 = arith.constant 0 : index
      %c0_12 = arith.constant 0 : index
      %13 = vector.load %arg6[%c0_11, %c0_12] : memref<8x128xf32, #tpu.memory_space<vmem>>, vector<8x128xf32>
      tpu.vector_store %arg6[%c0_11, %c0_12], %12 {strides = array<i32>} : memref<8x128xf32, #tpu.memory_space<vmem>>, vector<8x128xf32>,
    } else {
    }
    %c0 = arith.constant 0 : index
    %c0_1 = arith.constant 0 : index
    %3 = vector.load %arg6[%c0, %c0_1] : memref<8x128xf32, #tpu.memory_space<vmem>>, vector<8x128xf32>
    %c0_2 = arith.constant 0 : index
    %c0_3 = arith.constant 0 : index
    %4 = vector.load %arg2[%c0_2, %c0_3] : memref<8x128xbf16, #tpu.memory_space<vmem>>, vector<8x128xbf16>
    %c0_4 = arith.constant 0 : index
    %c0_5 = arith.constant 0 : index
    %5 = vector.load %arg3[%c0_4, %c0_5] : memref<128x128xbf16, #tpu.memory_space<vmem>>, vector<128x128xbf16>
    %cst = arith.constant dense<0.000000e+00> : vector<8x128xf32>
    %6 = tpu.matmul %4, %5, %cst {dimension_numbers = #tpu.dot_dimension_numbers<[1], [0], [0], [1], [0, 0, 1, 1], [], []>} : vector<8x128xbf16>, vector<128x128xbf16>, vector<8x128xf32> -> vector<8x128xf32>
    %7 = arith.addf %3, %6 : vector<8x128xf32>
    %c0_6 = arith.constant 0 : index
    %c0_7 = arith.constant 0 : index
    %8 = vector.load %arg6[%c0_6, %c0_7] : memref<8x128xf32, #tpu.memory_space<vmem>>, vector<8x128xf32>
    tpu.vector_store %arg6[%c0_6, %c0_7], %7 {strides = array<i32>} : memref<8x128xf32, #tpu.memory_space<vmem>>, vector<8x128xf32>,
    %c0_i32_8 = arith.constant 0 : i32
    %9 = arith.cmpi eq, %arg1, %c0_i32_8 : i32
    %10 = arith.extui %9 : i1 to i32
    %c0_i32_9 = arith.constant 0 : i32
    %11 = arith.cmpi ne, %10, %c0_i32_9 : i32
    scf.if %11 {
      %c0_10 = arith.constant 0 : index
      %c0_11 = arith.constant 0 : index
      %12 = vector.load %arg6[%c0_10, %c0_11] : memref<8x128xf32, #tpu.memory_space<vmem>>, vector<8x128xf32>
      %c0_12 = arith.constant 0 : index
      %c0_13 = arith.constant 0 : index
      %13 = vector.load %arg4[%c0_12, %c0_13] : memref<1x128xf32, #tpu.memory_space<vmem>>, vector<1x128xf32>
      %14 = vector.broadcast %13 : vector<1x128xf32> to vector<8x128xf32>
      %15 = arith.addf %12, %14 : vector<8x128xf32>
      %cst_14 = arith.constant dense<0xFF800000> : vector<8xf32>
      %16 = vector.multi_reduction <maximumf>, %15, %cst_14 [1] : vector<8x128xf32> to vector<8xf32>
      %17 = vector.shape_cast %16 : vector<8xf32> to vector<8x1xf32>
      %18 = vector.broadcast %17 : vector<8x1xf32> to vector<8x128xf32>
      %19 = arith.subf %15, %18 : vector<8x128xf32>
      %20 = math.exp %19 : vector<8x128xf32>
      %cst_15 = arith.constant dense<0.000000e+00> : vector<8xf32>
      %21 = vector.multi_reduction <add>, %20, %cst_15 [1] : vector<8x128xf32> to vector<8xf32>
      %22 = vector.shape_cast %21 : vector<8xf32> to vector<8x1xf32>
      %23 = math.log %22 : vector<8x1xf32>
      %24 = vector.broadcast %23 : vector<8x1xf32> to vector<8x128xf32>
      %25 = arith.subf %19, %24 : vector<8x128xf32>
      %c0_16 = arith.constant 0 : index
      %c0_17 = arith.constant 0 : index
      %26 = vector.load %arg5[%c0_16, %c0_17] : memref<8x128xf32, #tpu.memory_space<vmem>>, vector<8x128xf32>
      tpu.vector_store %arg5[%c0_16, %c0_17], %25 {strides = array<i32>} : memref<8x128xf32, #tpu.memory_space<vmem>>, vector<8x128xf32>,
    } else {
    }
    return
  }
  func.func @transform_0(%arg0: i32, %arg1: i32) -> (i32, i32) {
    %c0_i32 = arith.constant 0 : i32
    return %arg0, %arg1 : i32, i32
  }
  func.func @transform_1(%arg0: i32, %arg1: i32) -> (i32, i32) {
    %c0_i32 = arith.constant 0 : i32
    %c0_i32_0 = arith.constant 0 : i32
    return %arg1, %c0_i32 : i32, i32
  }
  func.func @transform_2(%arg0: i32, %arg1: i32) -> (i32, i32) {
    %c0_i32 = arith.constant 0 : i32
    %c0_i32_0 = arith.constant 0 : i32
    %c0_i32_1 = arith.constant 0 : i32
    return %c0_i32, %c0_i32_0 : i32, i32
  }
  func.func @transform_3(%arg0: i32, %arg1: i32) -> (i32, i32) {
    %c0_i32 = arith.constant 0 : i32
    %c0_i32_0 = arith.constant 0 : i32
    return %arg0, %c0_i32 : i32, i32
  }
}

</mosaic_0001>

<llo_original>
// kernel: torch_logit_forward.1
$region0: #{torch_logit_forward.1}
  #allocation0 [shape = 'u32[]', space=smem, size = 0x4, offset = 0x4, fixed_abs, tag = 'smem constant byte address 0x4 - core index']
  #allocation1 [shape = 'u32[72,128]{1,0:T(1,128)}', space=vmem, size = 0x9000, scoped, tag = 'internal scratch']
  #allocation2 [shape = 'f32[8,128]{1,0:T(8,128)}', space=vmem, size = 0x1000, scoped, tag = 'scratch operand']
  %s0 = inlined_call_operand.vmem [shape: bf16[8,128], index: 0, kind: input, shape index: {}]
  %s1 = inlined_call_operand.hbm [shape: bf16[128,128], index: 1, kind: input, shape index: {}]
  %s2 = inlined_call_operand.vmem [shape: f32[1,128], index: 2, kind: input, shape index: {}]
  %s3 = inlined_call_operand.hbm [shape: f32[8,128], index: 3, kind: output, shape index: {}]
  %s4 = sld [smem:[#allocation0]]
  $region34: #{torch_logit_forward.1} parent=0
    _
  %s6 = ssub.s32 1, %s4
  %s7 = scalar_select 0, %s6, %s4
  $region1: #{torch_logit_forward.1} parent=0
    #allocation3 [shape = 'u8[32768]{0}', space=vmem, size = 0x8000, scoped, tag = 'input window, operand 1, single buffered']
    #allocation4 [shape = 's32[1]{0}', space=sflag, size = 0x4, scoped, tag = 'scoped memory for torch_logit_forward.1']
    #allocation5 [shape = 's32[1]{0}', space=sflag, size = 0x4, scoped, tag = 'scoped memory for torch_logit_forward.1']
    #allocation6 [shape = 'u8[4096]{0}', space=vmem, size = 0x1000, scoped, tag = 'output window, operand 0, single buffered']
    %8 = vsyncpa [#allocation4], 0
    %9 = vsyncpa [#allocation5], 0
    // Predicated region
    $region2: #{torch_logit_forward.1} parent=1 // pred_check
      _
    $region3: #{torch_logit_forward.1} parent=1 // pred_check_branch
      %11 = sbr.rel (0) target = $region5
    $region4: #{torch_logit_forward.1} parent=1 // pred_region
      _
    $region5: #{torch_logit_forward.1} parent=1 // pred_fallthru
      _
    // Predicated region
    $region6: #{torch_logit_forward.1} parent=1 // pred_check
      _
    $region7: #{torch_logit_forward.1} parent=1 // pred_check_branch
      %13 = sbr.rel (0) target = $region9
    $region8: #{torch_logit_forward.1} parent=1 // pred_region
      %15 = vsyncadd [#allocation4], 0
      %s16 = sshll.u32 %s1, 4
      %s17 = int_to_ptr.hbm [resolvable:$true] %s16
      %s18 = sshll.u32 [#allocation3], 4
      %s19 = int_to_ptr.vmem [resolvable:$true] %s18
      %24 = dma.hbm_to_vmem [thread:$0]  %s17, 1024, %s19, [#allocation4], 64, 64, 4
    $region9: #{torch_logit_forward.1} parent=1 // pred_fallthru
      _
    // Predicated region
    $region10: #{torch_logit_forward.1} parent=1 // pred_check
      _
    $region11: #{torch_logit_forward.1} parent=1 // pred_check_branch
      %26 = sbr.rel (0) target = $region13
    $region12: #{torch_logit_forward.1} parent=1 // pred_region
      _
    $region13: #{torch_logit_forward.1} parent=1 // pred_fallthru
      _
    // Predicated region
    $region14: #{torch_logit_forward.1} parent=1 // pred_check
      _
    $region15: #{torch_logit_forward.1} parent=1 // pred_check_branch
      %28 = sbr.rel (0) target = $region17
    $region16: #{torch_logit_forward.1} parent=1 // pred_region
      %30 = dma.done [#allocation4], 1024
    $region17: #{torch_logit_forward.1} parent=1 // pred_fallthru
      _
    %p31 = scmp.eq.s32.totalorder 0, 0
    // Predicated region
    $region18: #{torch_logit_forward.1} parent=1 // pred_check
      %p32 = pneg %p31
    $region19: #{torch_logit_forward.1} parent=1 // pred_check_branch
      %34 = sbr.rel (%p32) target = $region21
    $region20: #{torch_logit_forward.1} parent=1 // pred_region
      %35 = vst [vmem:[#allocation2] sm:$0xff] 0.0
    $region21: #{torch_logit_forward.1} parent=1 // pred_fallthru
      _
    %v36 = vld [vmem:[#allocation2] sm:$0xff]
    %v37 = vld [vmem:[%s0] sm:$0xf]
    %v38 = vld [vmem:[#allocation3] sm:$0xf]
    %v39 = vld [vmem:[#allocation3 + $0x4] sm:$0xf]
    %v40 = vld [vmem:[#allocation3 + $0x8] sm:$0xf]
    %v41 = vld [vmem:[#allocation3 + $0xc] sm:$0xf]
    %v42 = vld [vmem:[#allocation3 + $0x10] sm:$0xf]
    %v43 = vld [vmem:[#allocation3 + $0x14] sm:$0xf]
    %v44 = vld [vmem:[#allocation3 + $0x18] sm:$0xf]
    %v45 = vld [vmem:[#allocation3 + $0x1c] sm:$0xf]
    %v46 = vld [vmem:[#allocation3 + $0x20] sm:$0xf]
    %v47 = vld [vmem:[#allocation3 + $0x24] sm:$0xf]
    %v48 = vld [vmem:[#allocation3 + $0x28] sm:$0xf]
    %v49 = vld [vmem:[#allocation3 + $0x2c] sm:$0xf]
    %v50 = vld [vmem:[#allocation3 + $0x30] sm:$0xf]
    %v51 = vld [vmem:[#allocation3 + $0x34] sm:$0xf]
    %v52 = vld [vmem:[#allocation3 + $0x38] sm:$0xf]
    %v53 = vld [vmem:[#allocation3 + $0x3c] sm:$0xf]
    %v70 = vunpack.c.l.b16 %v38
    %v71 = vunpack.c.l.b16 %v39
    %v72 = vunpack.c.l.b16 %v40
    %v73 = vunpack.c.l.b16 %v41
    %v74 = vunpack.c.l.b16 %v42
    %v75 = vunpack.c.l.b16 %v43
    %v76 = vunpack.c.l.b16 %v44
    %v77 = vunpack.c.l.b16 %v45
    %v78 = vunpack.c.l.b16 %v46
    %v79 = vunpack.c.l.b16 %v47
    %v80 = vunpack.c.l.b16 %v48
    %v81 = vunpack.c.l.b16 %v49
    %v82 = vunpack.c.l.b16 %v50
    %v83 = vunpack.c.l.b16 %v51
    %v84 = vunpack.c.l.b16 %v52
    %v85 = vunpack.c.l.b16 %v53
    %v86 = vpack.c.b16 %v71, %v70
    %v87 = vpack.c.b16 %v73, %v72
    %v88 = vpack.c.b16 %v75, %v74
    %v89 = vpack.c.b16 %v77, %v76
    %v90 = vpack.c.b16 %v79, %v78
    %v91 = vpack.c.b16 %v81, %v80
    %v92 = vpack.c.b16 %v83, %v82
    %v93 = vpack.c.b16 %v85, %v84
    %102 = vmatpush.bf16.msra.mxu0 %v93
    %103 = vmatpush.bf16.msra.mxu0 %v92
    %104 = vmatpush.bf16.msra.mxu0 %v91
    %105 = vmatpush.bf16.msra.mxu0 %v90
    %106 = vmatpush.bf16.msra.mxu0 %v89
    %107 = vmatpush.bf16.msra.mxu0 %v88
    %108 = vmatpush.bf16.msra.mxu0 %v87
    %109 = vmatpush.bf16.msra.mxu0 %v86
    %110 = vmatmul.bf16.gmra.mxu0 %v37
    %v111 = vpop.f32.mrf.mxu0
    %v112 = vadd.f32 0.0, %v111
    %v113 = vpop.f32.mrf.mxu0
    %114 = vdwg.mxu0
    %v115 = vadd.f32 %v36, %v112
    %116 = vst [vmem:[#allocation2] sm:$0xff] %v115
    // Predicated region
    $region22: #{torch_logit_forward.1} parent=1 // pred_check
      %p117 = pneg %p31
    $region23: #{torch_logit_forward.1} parent=1 // pred_check_branch
      %119 = sbr.rel (%p117) target = $region25
    $region24: #{torch_logit_forward.1} parent=1 // pred_region
      %v120 = vld [vmem:[#allocation2] sm:$0xff]
      %v121 = vld [vmem:[%s2] sm:$0x1]
      %v123 = vperm.slane %v121, 0
      %v125 = vadd.f32 %v120, %v123
      %126 = vmax.xlane.f32.xlu0 %v125
      %v127 = vpop.xlane.xlu0 %126
      %v128 = vsub.f32 %v125, %v127
      %v129 = vmul.f32 %v128, 1.442695
      %v130 = vpow.pop %v129
      %131 = vadd.xlane.f32.xlu0 %v130
      %v132 = vpop.xlane.xlu0 %131
      %v133 = vlog2.pop %v132
      %v134 = vmul.f32 %v133, 0.6931472
      %v135 = vsub.f32 %v128, %v134
      %136 = vst [vmem:[#allocation6] sm:$0xff] %v135
    $region25: #{torch_logit_forward.1} parent=1 // pred_fallthru
      _
    // Predicated region
    $region26: #{torch_logit_forward.1} parent=1 // pred_check
      _
    $region27: #{torch_logit_forward.1} parent=1 // pred_check_branch
      %138 = sbr.rel (0) target = $region29
    $region28: #{torch_logit_forward.1} parent=1 // pred_region
      %140 = vsyncadd [#allocation5], 0
      %s142 = sshll.u32 [#allocation6], 4
      %s143 = int_to_ptr.vmem [resolvable:$true] %s142
      %s144 = sshll.u32 %s3, 4
      %s145 = int_to_ptr.hbm [resolvable:$true] %s144
      %147 = dma.vmem_to_hbm [thread:$0]  %s143, 128, %s145, [#allocation5]
    $region29: #{torch_logit_forward.1} parent=1 // pred_fallthru
      _
    // Predicated region
    $region30: #{torch_logit_forward.1} parent=1 // pred_check
      _
    $region31: #{torch_logit_forward.1} parent=1 // pred_check_branch
      %149 = sbr.rel (0) target = $region33
    $region32: #{torch_logit_forward.1} parent=1 // pred_region
      %151 = dma.done [#allocation5], 128
    $region33: #{torch_logit_forward.1} parent=1 // pred_fallthru
      _
    %152 = vsyncpa [#allocation4], 1
    %153 = vsyncpa [#allocation5], 1

</llo_original>
